<compile_context>
chip_gen: v5e
topology: v5e:2x2
jax: 0.10.0
libtpu: 0.0.40
codegen_flags: <defaults>
</compile_context>

<pallas_src>
import functools

import jax
import jax.numpy as jnp
from jax.experimental import pallas as pl
from jax.experimental.pallas import tpu as pltpu  # noqa: F401  (TPU backend)

LANE = 128  # TPU lane width; all feature slabs are padded to this for dense vst.


def _gatvx_fused_kernel(x_ref, w1_ref, w2_ref, adj_ref, o_ref, *,
                        negative_slope, hidden, n_class):
    # Neighbor mask computed once, reused by both layers.
    mask = adj_ref[...] > 0.0                                         # (N, N)

    def attention_aggregate(h_aug, s_col):
        # h_aug: (N, LANE); columns [s_col] / [s_col+1] hold the per-node
        # src / dst attention logits (folded into the projection matmul).
        s_src = h_aug[:, s_col:s_col + 1]                             # (N, 1)
        s_dst = h_aug[:, s_col + 1:s_col + 2]                         # (N, 1)
        e = s_src + jnp.transpose(s_dst)                              # (N, N)
        e = jnp.where(e >= 0, e, negative_slope * e)                  # leaky relu
        e = jnp.where(mask, e, -1e30)                                 # single mask select
        m = jnp.max(e, axis=-1, keepdims=True)
        p = jnp.exp(e - m)                                            # masked -> exp(-huge) = 0
        denom = jnp.maximum(jnp.sum(p, axis=-1, keepdims=True), 1e-30)
        # Unnormalized aggregation on the MXU; normalize the (N, LANE) result
        # (cheaper than scaling the (N, N) prob tile).
        acc = jnp.dot(p, h_aug, preferred_element_type=jnp.float32)   # (N, LANE)
        r = pl.reciprocal(denom, approx=True)                         # EUP slot
        r = r * (2.0 - denom * r)                                     # 1 Newton-Raphson step
        return acc * r

    x = x_ref[...]                                                    # (N, Fin)

    # ---- layer 1: projection + attention scores in one MXU pass ----
    h1 = jnp.dot(x, w1_ref[...], preferred_element_type=jnp.float32)  # (N, LANE)
    z1 = attention_aggregate(h1, hidden)                              # (N, LANE)
    z1 = jnp.where(z1 > 0, z1, jnp.exp(z1) - 1.0)                     # ELU

    # ---- layer 2 (w2_aug has zero rows past `hidden`, neutralizing pad lanes) ----
    h2 = jnp.dot(z1, w2_ref[...], preferred_element_type=jnp.float32)  # (N, LANE)
    out = attention_aggregate(h2, n_class)                             # (N, LANE)

    # ---- log_softmax over the real n_class lanes only ----
    n, lane = out.shape
    col = jax.lax.broadcasted_iota(jnp.int32, (n, lane), 1)
    valid = col < n_class
    masked = jnp.where(valid, out, -1e30)
    mm = jnp.max(masked, axis=-1, keepdims=True)
    z = out - mm
    sumexp = jnp.sum(jnp.where(valid, jnp.exp(z), 0.0), axis=-1, keepdims=True)
    # Full 128-lane store (unmasked vst); wrapper slices the first n_class cols.
    o_ref[...] = (z - jnp.log(sumexp)).astype(o_ref.dtype)


def _augment(w, a_src, a_dst, lane):
    """[W | W @ a_src^T | W @ a_dst^T | 0 ...] padded to `lane` columns."""
    fin, fout = w.shape
    cols = jnp.concatenate([w, w @ a_src.T, w @ a_dst.T], axis=1)     # (fin, fout + 2)
    return jnp.pad(cols, ((0, 0), (0, lane - (fout + 2)))).astype(jnp.float32)


def prepare_params(params):
    """One-time host-side prep: fold attention reductions into the projections.

    Done ONCE (not per forward) so the fused kernel call is the only per-call
    dispatch at small N.
    """
    (w1, a1_src, a1_dst), (w2, a2_src, a2_dst) = params
    hidden = w1.shape[1]
    n_class = w2.shape[1]
    assert hidden + 2 <= LANE and n_class + 2 <= LANE

    w1_aug = _augment(w1, a1_src, a1_dst, LANE)                       # (Fin, LANE)
    w2_aug = jnp.zeros((LANE, LANE), jnp.float32).at[:hidden, :].set(
        _augment(w2, a2_src, a2_dst, LANE))                           # (LANE, LANE)
    # Materialize once.
    w1_aug = jax.block_until_ready(w1_aug)
    w2_aug = jax.block_until_ready(w2_aug)
    return w1_aug, w2_aug, hidden, n_class


@functools.partial(jax.jit,
                   static_argnames=("hidden", "n_class", "negative_slope"))
def gatvx_forward(X, A, w1_aug, w2_aug, *, hidden, n_class, negative_slope=0.2):
    """Fused GATvX forward pass (eval mode: dropout is identity)."""
    N, _ = X.shape
    kernel = functools.partial(
        _gatvx_fused_kernel,
        negative_slope=negative_slope,
        hidden=hidden,
        n_class=n_class,
    )
    # Gridless call: whole arrays are single VMEM-resident blocks; no pipeline
    # double-buffering for a 1-step problem.
    out_pad = pl.pallas_call(
        kernel,
        out_shape=jax.ShapeDtypeStruct((N, LANE), jnp.float32),
    )(X, w1_aug, w2_aug, A)
    # Slice fuses under jit; drop it entirely if the consumer accepts the
    # 128-lane padded slab.
    return out_pad[:, :n_class]


def _reference_forward(X, A, params):
    """Pure-JAX reference of the same math, for a correctness check."""
    def layer(x, w, a_s, a_d, adj, elu, logsm):
        h = x @ w
        e = jnp.sum(h * a_s, -1, keepdims=True) + jnp.sum(h * a_d, -1)[None, :]
        e = jnp.where(e >= 0, e, 0.2 * e)
        mask = adj > 0
        e = jnp.where(mask, e, -1e30)
        p = jnp.exp(e - e.max(-1, keepdims=True))
        p = jnp.where(mask, p, 0.0)
        alpha = p / p.sum(-1, keepdims=True)
        o = alpha @ h
        if elu:
            o = jnp.where(o > 0, o, jnp.exp(o) - 1.0)
        if logsm:
            o = jax.nn.log_softmax(o, axis=-1)
        return o
    (w1, a1s, a1d), (w2, a2s, a2d) = params
    h = layer(X, w1, a1s, a1d, A, True, False)
    return layer(h, w2, a2s, a2d, A, False, True)


if __name__ == "__main__":
    N = 16          # number of graph nodes
    n_feats = 32    # input feature dim
    hidden = 64     # GATConv hidden size (from the module: out_channels=64)
    n_class = 8     # number of classes

    key = jax.random.PRNGKey(0)
    kx, ka, kw1, ka1, kw2, ka2 = jax.random.split(key, 6)

    X = jax.random.normal(kx, (N, n_feats), dtype=jnp.float32)

    # Random symmetric adjacency with self loops (self loops guarantee every
    # row has >= 1 unmasked entry; the kernel's softmax relies on that).
    A = (jax.random.uniform(ka, (N, N)) < 0.3).astype(jnp.float32)
    A = jnp.maximum(A, A.T)
    A = jnp.maximum(A, jnp.eye(N, dtype=jnp.float32))

    # Deterministic parameter init (Glorot-ish scaling).
    w1 = jax.random.normal(kw1, (n_feats, hidden), dtype=jnp.float32) * (1.0 / jnp.sqrt(n_feats))
    a1 = jax.random.normal(ka1, (2, hidden), dtype=jnp.float32) * (1.0 / jnp.sqrt(hidden))
    a1_src, a1_dst = a1[0:1, :], a1[1:2, :]

    w2 = jax.random.normal(kw2, (hidden, n_class), dtype=jnp.float32) * (1.0 / jnp.sqrt(hidden))
    a2 = jax.random.normal(ka2, (2, n_class), dtype=jnp.float32) * (1.0 / jnp.sqrt(n_class))
    a2_src, a2_dst = a2[0:1, :], a2[1:2, :]

    params = ((w1, a1_src, a1_dst), (w2, a2_src, a2_dst))

    # One-time weight augmentation (cached across forwards).
    w1_aug, w2_aug, hidden_, n_class_ = prepare_params(params)

    out = gatvx_forward(X, A, w1_aug, w2_aug, hidden=hidden_, n_class=n_class_)
    out = jax.block_until_ready(out)

    ref = _reference_forward(X, A, params)
    assert out.shape == (N, n_class)
    assert jnp.allclose(out, ref, atol=1e-4, rtol=1e-4), "mismatch vs reference"

    print("KERNEL_OK")
</pallas_src>

<mosaic_0001>
module attributes {stable_mosaic.version = 11 : i64} {
  func.func @_gatvx_fused_kernel(%arg0: memref<16x32xf32, #tpu.memory_space<vmem>>, %arg1: memref<32x128xf32, #tpu.memory_space<vmem>>, %arg2: memref<128x128xf32, #tpu.memory_space<vmem>>, %arg3: memref<16x16xf32, #tpu.memory_space<vmem>>, %arg4: memref<16x128xf32, #tpu.memory_space<vmem>>) attributes {dimension_semantics = [], scalar_prefetch = 0 : i64, scratch_operands = 0 : i64, tpu.core_type = #tpu.core_type<tc>} {
    %c0 = arith.constant 0 : index
    %c0_0 = arith.constant 0 : index
    %0 = vector.load %arg3[%c0, %c0_0] : memref<16x16xf32, #tpu.memory_space<vmem>>, vector<16x16xf32>
    %cst = arith.constant 0.000000e+00 : f32
    %1 = vector.broadcast %cst : f32 to vector<16x16xf32>
    %2 = arith.cmpf ogt, %0, %1 : vector<16x16xf32>
    %c0_1 = arith.constant 0 : index
    %c0_2 = arith.constant 0 : index
    %3 = vector.load %arg0[%c0_1, %c0_2] : memref<16x32xf32, #tpu.memory_space<vmem>>, vector<16x32xf32>
    %c0_3 = arith.constant 0 : index
    %c0_4 = arith.constant 0 : index
    %4 = vector.load %arg1[%c0_3, %c0_4] : memref<32x128xf32, #tpu.memory_space<vmem>>, vector<32x128xf32>
    %cst_5 = arith.constant dense<0.000000e+00> : vector<16x128xf32>
    %5 = tpu.matmul %3, %4, %cst_5 {dimension_numbers = #tpu.dot_dimension_numbers<[1], [0], [0], [1], [0, 0, 1, 1], [], []>} : vector<16x32xf32>, vector<32x128xf32>, vector<16x128xf32> -> vector<16x128xf32>
    %6 = vector.extract_strided_slice %5 {offsets = [0, 64], sizes = [16, 1], strides = [1, 1]} : vector<16x128xf32> to vector<16x1xf32>
    %7 = vector.extract_strided_slice %5 {offsets = [0, 65], sizes = [16, 1], strides = [1, 1]} : vector<16x128xf32> to vector<16x1xf32>
    %8 = tpu.transpose %7, [1, 0] : vector<16x1xf32> -> vector<1x16xf32>
    %9 = vector.broadcast %6 : vector<16x1xf32> to vector<16x16xf32>
    %10 = vector.broadcast %8 : vector<1x16xf32> to vector<16x16xf32>
    %11 = arith.addf %9, %10 : vector<16x16xf32>
    %cst_6 = arith.constant 0.000000e+00 : f32
    %12 = vector.broadcast %cst_6 : f32 to vector<16x16xf32>
    %13 = arith.cmpf oge, %11, %12 : vector<16x16xf32>
    %cst_7 = arith.constant 2.000000e-01 : f32
    %14 = vector.broadcast %cst_7 : f32 to vector<16x16xf32>
    %15 = arith.mulf %14, %11 : vector<16x16xf32>
    %16 = arith.select %13, %11, %15 : vector<16x16xi1>, vector<16x16xf32>
    %cst_8 = arith.constant -1.000000e+30 : f32
    %17 = vector.broadcast %cst_8 : f32 to vector<16x16xf32>
    %18 = arith.select %2, %16, %17 : vector<16x16xi1>, vector<16x16xf32>
    %cst_9 = arith.constant dense<0xFF800000> : vector<16xf32>
    %19 = vector.multi_reduction <maximumf>, %18, %cst_9 [1] : vector<16x16xf32> to vector<16xf32>
    %20 = vector.shape_cast %19 : vector<16xf32> to vector<16x1xf32>
    %21 = vector.broadcast %20 : vector<16x1xf32> to vector<16x16xf32>
    %22 = arith.subf %18, %21 : vector<16x16xf32>
    %23 = math.exp %22 : vector<16x16xf32>
    %cst_10 = arith.constant dense<0.000000e+00> : vector<16xf32>
    %24 = vector.multi_reduction <add>, %23, %cst_10 [1] : vector<16x16xf32> to vector<16xf32>
    %25 = vector.shape_cast %24 : vector<16xf32> to vector<16x1xf32>
    %cst_11 = arith.constant 1.000000e-30 : f32
    %26 = vector.broadcast %cst_11 : f32 to vector<16x1xf32>
    %27 = arith.maximumf %25, %26 : vector<16x1xf32>
    %cst_12 = arith.constant dense<0.000000e+00> : vector<16x128xf32>
    %28 = tpu.matmul %23, %5, %cst_12 {dimension_numbers = #tpu.dot_dimension_numbers<[1], [0], [0], [1], [0, 0, 1, 1], [], []>} : vector<16x16xf32>, vector<16x128xf32>, vector<16x128xf32> -> vector<16x128xf32>
    %29 = tpu.reciprocal %27 {approx = true} : vector<16x1xf32> -> vector<16x1xf32>
    %30 = arith.mulf %27, %29 : vector<16x1xf32>
    %cst_13 = arith.constant 2.000000e+00 : f32
    %31 = vector.broadcast %cst_13 : f32 to vector<16x1xf32>
    %32 = arith.subf %31, %30 : vector<16x1xf32>
    %33 = arith.mulf %29, %32 : vector<16x1xf32>
    %34 = vector.broadcast %33 : vector<16x1xf32> to vector<16x128xf32>
    %35 = arith.mulf %28, %34 : vector<16x128xf32>
    %cst_14 = arith.constant 0.000000e+00 : f32
    %36 = vector.broadcast %cst_14 : f32 to vector<16x128xf32>
    %37 = arith.cmpf ogt, %35, %36 : vector<16x128xf32>
    %38 = math.exp %35 : vector<16x128xf32>
    %cst_15 = arith.constant 1.000000e+00 : f32
    %39 = vector.broadcast %cst_15 : f32 to vector<16x128xf32>
    %40 = arith.subf %38, %39 : vector<16x128xf32>
    %41 = arith.select %37, %35, %40 : vector<16x128xi1>, vector<16x128xf32>
    %c0_16 = arith.constant 0 : index
    %c0_17 = arith.constant 0 : index
    %42 = vector.load %arg2[%c0_16, %c0_17] : memref<128x128xf32, #tpu.memory_space<vmem>>, vector<128x128xf32>
    %cst_18 = arith.constant dense<0.000000e+00> : vector<16x128xf32>
    %43 = tpu.matmul %41, %42, %cst_18 {dimension_numbers = #tpu.dot_dimension_numbers<[1], [0], [0], [1], [0, 0, 1, 1], [], []>} : vector<16x128xf32>, vector<128x128xf32>, vector<16x128xf32> -> vector<16x128xf32>
    %44 = vector.extract_strided_slice %43 {offsets = [0, 8], sizes = [16, 1], strides = [1, 1]} : vector<16x128xf32> to vector<16x1xf32>
    %45 = vector.extract_strided_slice %43 {offsets = [0, 9], sizes = [16, 1], strides = [1, 1]} : vector<16x128xf32> to vector<16x1xf32>
    %46 = tpu.transpose %45, [1, 0] : vector<16x1xf32> -> vector<1x16xf32>
    %47 = vector.broadcast %44 : vector<16x1xf32> to vector<16x16xf32>
    %48 = vector.broadcast %46 : vector<1x16xf32> to vector<16x16xf32>
    %49 = arith.addf %47, %48 : vector<16x16xf32>
    %cst_19 = arith.constant 0.000000e+00 : f32
    %50 = vector.broadcast %cst_19 : f32 to vector<16x16xf32>
    %51 = arith.cmpf oge, %49, %50 : vector<16x16xf32>
    %cst_20 = arith.constant 2.000000e-01 : f32
    %52 = vector.broadcast %cst_20 : f32 to vector<16x16xf32>
    %53 = arith.mulf %52, %49 : vector<16x16xf32>
    %54 = arith.select %51, %49, %53 : vector<16x16xi1>, vector<16x16xf32>
    %cst_21 = arith.constant -1.000000e+30 : f32
    %55 = vector.broadcast %cst_21 : f32 to vector<16x16xf32>
    %56 = arith.select %2, %54, %55 : vector<16x16xi1>, vector<16x16xf32>
    %cst_22 = arith.constant dense<0xFF800000> : vector<16xf32>
    %57 = vector.multi_reduction <maximumf>, %56, %cst_22 [1] : vector<16x16xf32> to vector<16xf32>
    %58 = vector.shape_cast %57 : vector<16xf32> to vector<16x1xf32>
    %59 = vector.broadcast %58 : vector<16x1xf32> to vector<16x16xf32>
    %60 = arith.subf %56, %59 : vector<16x16xf32>
    %61 = math.exp %60 : vector<16x16xf32>
    %cst_23 = arith.constant dense<0.000000e+00> : vector<16xf32>
    %62 = vector.multi_reduction <add>, %61, %cst_23 [1] : vector<16x16xf32> to vector<16xf32>
    %63 = vector.shape_cast %62 : vector<16xf32> to vector<16x1xf32>
    %cst_24 = arith.constant 1.000000e-30 : f32
    %64 = vector.broadcast %cst_24 : f32 to vector<16x1xf32>
    %65 = arith.maximumf %63, %64 : vector<16x1xf32>
    %cst_25 = arith.constant dense<0.000000e+00> : vector<16x128xf32>
    %66 = tpu.matmul %61, %43, %cst_25 {dimension_numbers = #tpu.dot_dimension_numbers<[1], [0], [0], [1], [0, 0, 1, 1], [], []>} : vector<16x16xf32>, vector<16x128xf32>, vector<16x128xf32> -> vector<16x128xf32>
    %67 = tpu.reciprocal %65 {approx = true} : vector<16x1xf32> -> vector<16x1xf32>
    %68 = arith.mulf %65, %67 : vector<16x1xf32>
    %cst_26 = arith.constant 2.000000e+00 : f32
    %69 = vector.broadcast %cst_26 : f32 to vector<16x1xf32>
    %70 = arith.subf %69, %68 : vector<16x1xf32>
    %71 = arith.mulf %67, %70 : vector<16x1xf32>
    %72 = vector.broadcast %71 : vector<16x1xf32> to vector<16x128xf32>
    %73 = arith.mulf %66, %72 : vector<16x128xf32>
    %74 = tpu.iota {dimensions = array<i32: 1>} : vector<16x128xi32>
    %c8_i32 = arith.constant 8 : i32
    %75 = vector.broadcast %c8_i32 : i32 to vector<16x128xi32>
    %76 = arith.cmpi slt, %74, %75 : vector<16x128xi32>
    %cst_27 = arith.constant -1.000000e+30 : f32
    %77 = vector.broadcast %cst_27 : f32 to vector<16x128xf32>
    %78 = arith.select %76, %73, %77 : vector<16x128xi1>, vector<16x128xf32>
    %cst_28 = arith.constant dense<0xFF800000> : vector<16xf32>
    %79 = vector.multi_reduction <maximumf>, %78, %cst_28 [1] : vector<16x128xf32> to vector<16xf32>
    %80 = vector.shape_cast %79 : vector<16xf32> to vector<16x1xf32>
    %81 = vector.broadcast %80 : vector<16x1xf32> to vector<16x128xf32>
    %82 = arith.subf %73, %81 : vector<16x128xf32>
    %83 = math.exp %82 : vector<16x128xf32>
    %cst_29 = arith.constant 0.000000e+00 : f32
    %84 = vector.broadcast %cst_29 : f32 to vector<16x128xf32>
    %85 = arith.select %76, %83, %84 : vector<16x128xi1>, vector<16x128xf32>
    %cst_30 = arith.constant dense<0.000000e+00> : vector<16xf32>
    %86 = vector.multi_reduction <add>, %85, %cst_30 [1] : vector<16x128xf32> to vector<16xf32>
    %87 = vector.shape_cast %86 : vector<16xf32> to vector<16x1xf32>
    %88 = math.log %87 : vector<16x1xf32>
    %89 = vector.broadcast %88 : vector<16x1xf32> to vector<16x128xf32>
    %90 = arith.subf %82, %89 : vector<16x128xf32>
    %c0_31 = arith.constant 0 : index
    %c0_32 = arith.constant 0 : index
    %91 = vector.load %arg4[%c0_31, %c0_32] : memref<16x128xf32, #tpu.memory_space<vmem>>, vector<16x128xf32>
    tpu.vector_store %arg4[%c0_31, %c0_32], %90 {strides = array<i32>} : memref<16x128xf32, #tpu.memory_space<vmem>>, vector<16x128xf32>,
    return
  }
}

</mosaic_0001>

<llo_original>
// kernel: gatvx_forward.1
$region0: #{gatvx_forward.1}
  #allocation0 [shape = 'u32[]', space=smem, size = 0x4, offset = 0x4, fixed_abs, tag = 'smem constant byte address 0x4 - core index']
  #allocation1 [shape = 'u32[72,128]{1,0:T(1,128)}', space=vmem, size = 0x9000, scoped, tag = 'internal scratch']
  %s0 = inlined_call_operand.hbm [shape: f32[16,32], index: 0, kind: input, shape index: {}]
  %s1 = inlined_call_operand.hbm [shape: f32[32,128], index: 1, kind: input, shape index: {}]
  %s2 = inlined_call_operand.hbm [shape: f32[128,128], index: 2, kind: input, shape index: {}]
  %s3 = inlined_call_operand.hbm [shape: f32[16,16], index: 3, kind: input, shape index: {}]
  %s4 = inlined_call_operand.vmem [shape: f32[16,128], index: 4, kind: output, shape index: {}]
  %s5 = sld [smem:[#allocation0]]
  $region42: #{gatvx_forward.1} parent=0
    _
  %s7 = ssub.s32 1, %s5
  %s8 = scalar_select 0, %s7, %s5
  $region1: #{gatvx_forward.1} parent=0
    #allocation2 [shape = 'u8[8192]{0}', space=vmem, size = 0x2000, scoped, tag = 'input window, operand 0, single buffered']
    #allocation3 [shape = 's32[1]{0}', space=sflag, size = 0x4, scoped, tag = 'scoped memory for gatvx_forward.1']
    #allocation4 [shape = 'u8[16384]{0}', space=vmem, size = 0x4000, scoped, tag = 'input window, operand 1, single buffered']
    #allocation5 [shape = 's32[1]{0}', space=sflag, size = 0x4, scoped, tag = 'scoped memory for gatvx_forward.1']
    #allocation6 [shape = 'u8[65536]{0}', space=vmem, size = 0x10000, scoped, tag = 'input window, operand 2, single buffered']
    #allocation7 [shape = 'u8[8192]{0}', space=vmem, size = 0x2000, scoped, tag = 'input window, operand 3, single buffered']
    #allocation8 [shape = 's32[1]{0}', space=sflag, size = 0x4, scoped, tag = 'scoped memory for gatvx_forward.1']
    %9 = vsyncpa [#allocation3], 0
    %10 = vsyncpa [#allocation5], 0
    %11 = vsyncpa [#allocation8], 0
    // Predicated region
    $region2: #{gatvx_forward.1} parent=1 // pred_check
      _
    $region3: #{gatvx_forward.1} parent=1 // pred_check_branch
      %13 = sbr.rel (0) target = $region5
    $region4: #{gatvx_forward.1} parent=1 // pred_region
      %15 = vsyncadd [#allocation3], 0
      %s16 = sshll.u32 %s0, 4
      %s17 = int_to_ptr.hbm [resolvable:$true] %s16
      %s18 = sshll.u32 [#allocation2], 4
      %s19 = int_to_ptr.vmem [resolvable:$true] %s18
      %24 = dma.hbm_to_vmem [thread:$0]  %s17, 256, %s19, [#allocation3], 128, 128, 8
    $region5: #{gatvx_forward.1} parent=1 // pred_fallthru
      _
    // Predicated region
    $region6: #{gatvx_forward.1} parent=1 // pred_check
      _
    $region7: #{gatvx_forward.1} parent=1 // pred_check_branch
      %26 = sbr.rel (0) target = $region9
    $region8: #{gatvx_forward.1} parent=1 // pred_region
      %28 = vsyncadd [#allocation5], 0
      %s29 = sshll.u32 %s1, 4
      %s30 = int_to_ptr.hbm [resolvable:$true] %s29
      %s31 = sshll.u32 [#allocation4], 4
      %s32 = int_to_ptr.vmem [resolvable:$true] %s31
      %37 = dma.hbm_to_vmem [thread:$0]  %s30, 512, %s32, [#allocation5], 128, 128, 8
    $region9: #{gatvx_forward.1} parent=1 // pred_fallthru
      _
    // Predicated region
    $region10: #{gatvx_forward.1} parent=1 // pred_check
      _
    $region11: #{gatvx_forward.1} parent=1 // pred_check_branch
      %39 = sbr.rel (0) target = $region13
    $region12: #{gatvx_forward.1} parent=1 // pred_region
      %41 = vsyncadd [#allocation5], 0
      %s42 = sshll.u32 %s2, 4
      %s43 = int_to_ptr.hbm [resolvable:$true] %s42
      %s44 = sshll.u32 [#allocation6], 4
      %s45 = int_to_ptr.vmem [resolvable:$true] %s44
      %50 = dma.hbm_to_vmem [thread:$0]  %s43, 2048, %s45, [#allocation5], 128, 128, 8
    $region13: #{gatvx_forward.1} parent=1 // pred_fallthru
      _
    // Predicated region
    $region14: #{gatvx_forward.1} parent=1 // pred_check
      _
    $region15: #{gatvx_forward.1} parent=1 // pred_check_branch
      %52 = sbr.rel (0) target = $region17
    $region16: #{gatvx_forward.1} parent=1 // pred_region
      %54 = vsyncadd [#allocation8], 0
      %s55 = sshll.u32 %s3, 4
      %s56 = int_to_ptr.hbm [resolvable:$true] %s55
      %s57 = sshll.u32 [#allocation7], 4
      %s58 = int_to_ptr.vmem [resolvable:$true] %s57
      %63 = dma.hbm_to_vmem [thread:$0]  %s56, 256, %s58, [#allocation8], 128, 128, 8
    $region17: #{gatvx_forward.1} parent=1 // pred_fallthru
      _
    // Predicated region
    $region18: #{gatvx_forward.1} parent=1 // pred_check
      _
    $region19: #{gatvx_forward.1} parent=1 // pred_check_branch
      %65 = sbr.rel (0) target = $region21
    $region20: #{gatvx_forward.1} parent=1 // pred_region
      %67 = dma.done [#allocation3], 256
    $region21: #{gatvx_forward.1} parent=1 // pred_fallthru
      _
    // Predicated region
    $region22: #{gatvx_forward.1} parent=1 // pred_check
      _
    $region23: #{gatvx_forward.1} parent=1 // pred_check_branch
      %69 = sbr.rel (0) target = $region25
    $region24: #{gatvx_forward.1} parent=1 // pred_region
      %71 = dma.done [#allocation5], 512
    $region25: #{gatvx_forward.1} parent=1 // pred_fallthru
      _
    // Predicated region
    $region26: #{gatvx_forward.1} parent=1 // pred_check
      _
    $region27: #{gatvx_forward.1} parent=1 // pred_check_branch
      %73 = sbr.rel (0) target = $region29
    $region28: #{gatvx_forward.1} parent=1 // pred_region
      %75 = dma.done [#allocation5], 2048
    $region29: #{gatvx_forward.1} parent=1 // pred_fallthru
      _
    // Predicated region
    $region30: #{gatvx_forward.1} parent=1 // pred_check
      _
    $region31: #{gatvx_forward.1} parent=1 // pred_check_branch
      %77 = sbr.rel (0) target = $region33
    $region32: #{gatvx_forward.1} parent=1 // pred_region
      %79 = dma.done [#allocation8], 256
    $region33: #{gatvx_forward.1} parent=1 // pred_fallthru
      _
    %v80 = vld [vmem:[#allocation7] sm:$0xff]
    %v81 = vld [vmem:[#allocation7 + $0x8] sm:$0xff]
    %vm82 = vcmp.gt.f32.partialorder %v80, 0.0
    %vm83 = vcmp.gt.f32.partialorder %v81, 0.0
    %v84 = vld [vmem:[#allocation2] sm:$0xff]
    %v85 = vld [vmem:[#allocation2 + $0x8] sm:$0xff]
    %v86 = vld [vmem:[#allocation4] sm:$0xff]
    %v87 = vld [vmem:[#allocation4 + $0x8] sm:$0xff]
    %v88 = vld [vmem:[#allocation4 + $0x10] sm:$0xff]
    %v89 = vld [vmem:[#allocation4 + $0x18] sm:$0xff]
    %vm90 = vcmask 261120
    %v92 = vsel %vm90, %v84, 0
    %v95 = vsel %vm90, %v85, 0
    %97 = vmatpush.msra.mxu0 0.0
    %98 = vmatpush.msra.mxu0 0.0
    %99 = vmatpush.msra.mxu0 0.0
    %100 = vmatpush.msra.mxu0 0.0
    %101 = vmatpush.msra.mxu0 0.0
    %102 = vmatpush.msra.mxu0 0.0
    %103 = vmatpush.msra.mxu0 0.0
    %104 = vmatpush.msra.mxu0 0.0
    %105 = vmatpush.msra.mxu0 0.0
    %106 = vmatpush.msra.mxu0 0.0
    %107 = vmatpush.msra.mxu0 0.0
    %108 = vmatpush.msra.mxu0 0.0
    %109 = vmatpush.msra.mxu0 %v89
    %110 = vmatpush.msra.mxu0 %v88
    %111 = vmatpush.msra.mxu0 %v87
    %112 = vmatpush.msra.mxu0 %v86
    %113 = vmatmul.f32.gmra.mxu0 %v92
    %v114 = vpop.f32.mrf.mxu0
    %v115 = vadd.f32 0.0, %v114
    %116 = vmatmul.f32.gmra.mxu0 %v95
    %v117 = vpop.f32.mrf.mxu0
    %v118 = vadd.f32 0.0, %v117
    %119 = vdwg.mxu0
    %122 = vrot.lane.b32.xlu0 %v115, 63
    %v123 = vpop.permute.xlu0 %122
    %124 = vrot.lane.b32.xlu0 %v118, 63
    %v125 = vpop.permute.xlu0 %124
    %128 = vxpose.xlu0.b32.start [1/16] %v123, 128
    %129 = vxpose.xlu0.b32.cont [2/16] %v125, 128
    %130 = vxpose.xlu0.b32.cont [3/16] 0.0, 128
    %131 = vxpose.xlu0.b32.cont [4/16] 0.0, 128
    %132 = vxpose.xlu0.b32.cont [5/16] 0.0, 128
    %133 = vxpose.xlu0.b32.cont [6/16] 0.0, 128
    %134 = vxpose.xlu0.b32.cont [7/16] 0.0, 128
    %135 = vxpose.xlu0.b32.cont [8/16] 0.0, 128
    %136 = vxpose.xlu0.b32.cont [9/16] 0.0, 128
    %137 = vxpose.xlu0.b32.cont [10/16] 0.0, 128
    %138 = vxpose.xlu0.b32.cont [11/16] 0.0, 128
    %139 = vxpose.xlu0.b32.cont [12/16] 0.0, 128
    %140 = vxpose.xlu0.b32.cont [13/16] 0.0, 128
    %141 = vxpose.xlu0.b32.cont [14/16] 0.0, 128
    %142 = vxpose.xlu0.b32.cont [15/16] 0.0, 128
    %143 = vxpose.xlu0.b32.end [16/16] 0.0, 128
    %v144 = vpop.trf.xlu0
    %v145 = vpop.trf.xlu0
    %v146 = vpop.trf.xlu0
    %v147 = vpop.trf.xlu0
    %v148 = vpop.trf.xlu0
    %v149 = vpop.trf.xlu0
    %v150 = vpop.trf.xlu0
    %v151 = vpop.trf.xlu0
    %v152 = vpop.trf.xlu0
    %v153 = vpop.trf.xlu0
    %v154 = vpop.trf.xlu0
    %v155 = vpop.trf.xlu0
    %v156 = vpop.trf.xlu0
    %v157 = vpop.trf.xlu0
    %v158 = vpop.trf.xlu0
    %v159 = vpop.trf.xlu0
    %160 = vset.pattern.permute.xlu0 64
    %161 = vperm.xlu0 %160, %v115
    %v162 = vpop.permute.xlu0 %161
    %164 = vset.pattern.permute.xlu0 64
    %165 = vperm.xlu0 %164, %v118
    %v166 = vpop.permute.xlu0 %165
    %v168 = vperm.slane %v144, 0
    %v169 = vadd.f32 %v162, %v168
    %v170 = vadd.f32 %v166, %v168
    %vm171 = vcmp.ge.f32.partialorder %v169, 0.0
    %vm172 = vcmp.ge.f32.partialorder %v170, 0.0
    %v173 = vmul.f32 %v169, 0.2
    %v174 = vmul.f32 %v170, 0.2
    %v175 = vsel %vm171, %v169, %v173
    %v176 = vsel %vm172, %v170, %v174
    %v177 = vsel %vm82, %v175, -1e+30
    %v178 = vsel %vm83, %v176, -1e+30
    %vm179 = vcmask 130048
    %v180 = vsel %vm179, %v177, -inf
    %181 = vmax.xlane.f32.xlu0 %v180
    %v182 = vpop.xlane.xlu0 %181
    %v183 = vsel %vm179, %v178, -inf
    %184 = vmax.xlane.f32.xlu0 %v183
    %v185 = vpop.xlane.xlu0 %184
    %v186 = vsub.f32 %v177, %v182
    %v187 = vsub.f32 %v178, %v185
    %v188 = vmul.f32 %v186, 1.442695
    %v189 = vpow.pop %v188
    %v190 = vmul.f32 %v187, 1.442695
    %v191 = vpow.pop %v190
    %v192 = vsel %vm179, %v189, 0.0
    %193 = vadd.xlane.f32.xlu0 %v192
    %v194 = vpop.xlane.xlu0 %193
    %v195 = vsel %vm179, %v191, 0.0
    %196 = vadd.xlane.f32.xlu0 %v195
    %v197 = vpop.xlane.xlu0 %196
    %v198 = vmax.f32 %v194, 1e-30
    %v199 = vmax.f32 %v197, 1e-30
    %v201 = vsel %vm179, %v189, 0
    %v204 = vsel %vm179, %v191, 0
    %206 = vmatpush.msra.mxu0 0.0
    %207 = vmatpush.msra.mxu0 0.0
    %208 = vmatpush.msra.mxu0 0.0
    %209 = vmatpush.msra.mxu0 0.0
    %210 = vmatpush.msra.mxu0 0.0
    %211 = vmatpush.msra.mxu0 0.0
    %212 = vmatpush.msra.mxu0 0.0
    %213 = vmatpush.msra.mxu0 0.0
    %214 = vmatpush.msra.mxu0 0.0
    %215 = vmatpush.msra.mxu0 0.0
    %216 = vmatpush.msra.mxu0 0.0
    %217 = vmatpush.msra.mxu0 0.0
    %218 = vmatpush.msra.mxu0 0.0
    %219 = vmatpush.msra.mxu0 0.0
    %220 = vmatpush.msra.mxu0 %v118
    %221 = vmatpush.msra.mxu0 %v115
    %222 = vmatmul.f32.gmra.mxu0 %v201
    %v223 = vpop.f32.mrf.mxu0
    %v224 = vadd.f32 0.0, %v223
    %225 = vmatmul.f32.gmra.mxu0 %v204
    %v226 = vpop.f32.mrf.mxu0
    %v227 = vadd.f32 0.0, %v226
    %228 = vdwg.mxu0
    %v229 = vrcp.pop %v198
    %v230 = vrcp.pop %v199
    %v231 = vmul.f32 %v198, %v229
    %v232 = vmul.f32 %v199, %v230
    %v233 = vsub.f32 2.0, %v231
    %v234 = vsub.f32 2.0, %v232
    %v235 = vmul.f32 %v229, %v233
    %v236 = vmul.f32 %v230, %v234
    %v237 = vmul.f32 %v224, %v235
    %v238 = vmul.f32 %v227, %v236
    %vm239 = vcmp.gt.f32.partialorder %v237, 0.0
    %vm240 = vcmp.gt.f32.partialorder %v238, 0.0
    %v241 = vmul.f32 %v237, 1.442695
    %v242 = vpow.pop %v241
    %v243 = vmul.f32 %v238, 1.442695
    %v244 = vpow.pop %v243
    %v245 = vsub.f32 %v242, 1.0
    %v246 = vsub.f32 %v244, 1.0
    %v247 = vsel %vm239, %v237, %v245
    %v248 = vsel %vm240, %v238, %v246
    %v249 = vld [vmem:[#allocation6] sm:$0xff]
    %v250 = vld [vmem:[#allocation6 + $0x8] sm:$0xff]
    %v251 = vld [vmem:[#allocation6 + $0x10] sm:$0xff]
    %v252 = vld [vmem:[#allocation6 + $0x18] sm:$0xff]
    %v253 = vld [vmem:[#allocation6 + $0x20] sm:$0xff]
    %v254 = vld [vmem:[#allocation6 + $0x28] sm:$0xff]
    %v255 = vld [vmem:[#allocation6 + $0x30] sm:$0xff]
    %v256 = vld [vmem:[#allocation6 + $0x38] sm:$0xff]
    %v257 = vld [vmem:[#allocation6 + $0x40] sm:$0xff]
    %v258 = vld [vmem:[#allocation6 + $0x48] sm:$0xff]
    %v259 = vld [vmem:[#allocation6 + $0x50] sm:$0xff]
    %v260 = vld [vmem:[#allocation6 + $0x58] sm:$0xff]
    %v261 = vld [vmem:[#allocation6 + $0x60] sm:$0xff]
    %v262 = vld [vmem:[#allocation6 + $0x68] sm:$0xff]
    %v263 = vld [vmem:[#allocation6 + $0x70] sm:$0xff]
    %v264 = vld [vmem:[#allocation6 + $0x78] sm:$0xff]
    %265 = vmatpush.msra.mxu0 %v264
    %266 = vmatpush.msra.mxu0 %v263
    %267 = vmatpush.msra.mxu0 %v262
    %268 = vmatpush.msra.mxu0 %v261
    %269 = vmatpush.msra.mxu0 %v260
    %270 = vmatpush.msra.mxu0 %v259
    %271 = vmatpush.msra.mxu0 %v258
    %272 = vmatpush.msra.mxu0 %v257
    %273 = vmatpush.msra.mxu0 %v256
    %274 = vmatpush.msra.mxu0 %v255
    %275 = vmatpush.msra.mxu0 %v254
    %276 = vmatpush.msra.mxu0 %v253
    %277 = vmatpush.msra.mxu0 %v252
    %278 = vmatpush.msra.mxu0 %v251
    %279 = vmatpush.msra.mxu0 %v250
    %280 = vmatpush.msra.mxu0 %v249
    %281 = vmatmul.f32.gmra.mxu0 %v247
    %v282 = vpop.f32.mrf.mxu0
    %v283 = vadd.f32 0.0, %v282
    %284 = vmatmul.f32.gmra.mxu0 %v248
    %v285 = vpop.f32.mrf.mxu0
    %v286 = vadd.f32 0.0, %v285
    %287 = vdwg.mxu0
    %290 = vrot.lane.b32.xlu0 %v283, 119
    %v291 = vpop.permute.xlu0 %290
    %292 = vrot.lane.b32.xlu0 %v286, 119
    %v293 = vpop.permute.xlu0 %292
    %296 = vxpose.xlu0.b32.start [1/16] %v291, 128
    %297 = vxpose.xlu0.b32.cont [2/16] %v293, 128
    %298 = vxpose.xlu0.b32.cont [3/16] 0.0, 128
    %299 = vxpose.xlu0.b32.cont [4/16] 0.0, 128
    %300 = vxpose.xlu0.b32.cont [5/16] 0.0, 128
    %301 = vxpose.xlu0.b32.cont [6/16] 0.0, 128
    %302 = vxpose.xlu0.b32.cont [7/16] 0.0, 128
    %303 = vxpose.xlu0.b32.cont [8/16] 0.0, 128
    %304 = vxpose.xlu0.b32.cont [9/16] 0.0, 128
    %305 = vxpose.xlu0.b32.cont [10/16] 0.0, 128
    %306 = vxpose.xlu0.b32.cont [11/16] 0.0, 128
    %307 = vxpose.xlu0.b32.cont [12/16] 0.0, 128
    %308 = vxpose.xlu0.b32.cont [13/16] 0.0, 128
    %309 = vxpose.xlu0.b32.cont [14/16] 0.0, 128
    %310 = vxpose.xlu0.b32.cont [15/16] 0.0, 128
    %311 = vxpose.xlu0.b32.end [16/16] 0.0, 128
    %v312 = vpop.trf.xlu0
    %v313 = vpop.trf.xlu0
    %v314 = vpop.trf.xlu0
    %v315 = vpop.trf.xlu0
    %v316 = vpop.trf.xlu0
    %v317 = vpop.trf.xlu0
    %v318 = vpop.trf.xlu0
    %v319 = vpop.trf.xlu0
    %v320 = vpop.trf.xlu0
    %v321 = vpop.trf.xlu0
    %v322 = vpop.trf.xlu0
    %v323 = vpop.trf.xlu0
    %v324 = vpop.trf.xlu0
    %v325 = vpop.trf.xlu0
    %v326 = vpop.trf.xlu0
    %v327 = vpop.trf.xlu0
    %328 = vset.pattern.permute.xlu0 8
    %329 = vperm.xlu0 %328, %v283
    %v330 = vpop.permute.xlu0 %329
    %332 = vset.pattern.permute.xlu0 8
    %333 = vperm.xlu0 %332, %v286
    %v334 = vpop.permute.xlu0 %333
    %v336 = vperm.slane %v312, 0
    %v337 = vadd.f32 %v330, %v336
    %v338 = vadd.f32 %v334, %v336
    %vm339 = vcmp.ge.f32.partialorder %v337, 0.0
    %vm340 = vcmp.ge.f32.partialorder %v338, 0.0
    %v341 = vmul.f32 %v337, 0.2
    %v342 = vmul.f32 %v338, 0.2
    %v343 = vsel %vm339, %v337, %v341
    %v344 = vsel %vm340, %v338, %v342
    %v345 = vsel %vm82, %v343, -1e+30
    %v346 = vsel %vm83, %v344, -1e+30
    %v347 = vsel %vm179, %v345, -inf
    %348 = vmax.xlane.f32.xlu0 %v347
    %v349 = vpop.xlane.xlu0 %348
    %v350 = vsel %vm179, %v346, -inf
    %351 = vmax.xlane.f32.xlu0 %v350
    %v352 = vpop.xlane.xlu0 %351
    %v353 = vsub.f32 %v345, %v349
    %v354 = vsub.f32 %v346, %v352
    %v355 = vmul.f32 %v353, 1.442695
    %v356 = vpow.pop %v355
    %v357 = vmul.f32 %v354, 1.442695
    %v358 = vpow.pop %v357
    %v359 = vsel %vm179, %v356, 0.0
    %360 = vadd.xlane.f32.xlu0 %v359
    %v361 = vpop.xlane.xlu0 %360
    %v362 = vsel %vm179, %v358, 0.0
    %363 = vadd.xlane.f32.xlu0 %v362
    %v364 = vpop.xlane.xlu0 %363
    %v365 = vmax.f32 %v361, 1e-30
    %v366 = vmax.f32 %v364, 1e-30
    %v368 = vsel %vm179, %v356, 0
    %v371 = vsel %vm179, %v358, 0
    %373 = vmatpush.msra.mxu0 0.0
    %374 = vmatpush.msra.mxu0 0.0
    %375 = vmatpush.msra.mxu0 0.0
    %376 = vmatpush.msra.mxu0 0.0
    %377 = vmatpush.msra.mxu0 0.0
    %378 = vmatpush.msra.mxu0 0.0
    %379 = vmatpush.msra.mxu0 0.0
    %380 = vmatpush.msra.mxu0 0.0
    %381 = vmatpush.msra.mxu0 0.0
    %382 = vmatpush.msra.mxu0 0.0
    %383 = vmatpush.msra.mxu0 0.0
    %384 = vmatpush.msra.mxu0 0.0
    %385 = vmatpush.msra.mxu0 0.0
    %386 = vmatpush.msra.mxu0 0.0
    %387 = vmatpush.msra.mxu0 %v286
    %388 = vmatpush.msra.mxu0 %v283
    %389 = vmatmul.f32.gmra.mxu0 %v368
    %v390 = vpop.f32.mrf.mxu0
    %v391 = vadd.f32 0.0, %v390
    %392 = vmatmul.f32.gmra.mxu0 %v371
    %v393 = vpop.f32.mrf.mxu0
    %v394 = vadd.f32 0.0, %v393
    %395 = vdwg.mxu0
    %v396 = vrcp.pop %v365
    %v397 = vrcp.pop %v366
    %v398 = vmul.f32 %v365, %v396
    %v399 = vmul.f32 %v366, %v397
    %v400 = vsub.f32 2.0, %v398
    %v401 = vsub.f32 2.0, %v399
    %v402 = vmul.f32 %v396, %v400
    %v403 = vmul.f32 %v397, %v401
    %v404 = vmul.f32 %v391, %v402
    %v405 = vmul.f32 %v394, %v403
    %v406 = vlaneseq
    %v407 = vand.u32 %v406, 127
    %vm408 = vcmp.lt.s32.totalorder %v407, 8
    %v409 = vsel %vm408, %v404, -1e+30
    %v410 = vsel %vm408, %v405, -1e+30
    %411 = vmax.xlane.f32.xlu0 %v409
    %v412 = vpop.xlane.xlu0 %411
    %413 = vmax.xlane.f32.xlu0 %v410
    %v414 = vpop.xlane.xlu0 %413
    %v415 = vsub.f32 %v404, %v412
    %v416 = vsub.f32 %v405, %v414
    %v417 = vmul.f32 %v415, 1.442695
    %v418 = vpow.pop %v417
    %v419 = vmul.f32 %v416, 1.442695
    %v420 = vpow.pop %v419
    %v421 = vsel %vm408, %v418, 0.0
    %v422 = vsel %vm408, %v420, 0.0
    %423 = vadd.xlane.f32.xlu0 %v421
    %v424 = vpop.xlane.xlu0 %423
    %425 = vadd.xlane.f32.xlu0 %v422
    %v426 = vpop.xlane.xlu0 %425
    %v427 = vlog2.pop %v424
    %v428 = vmul.f32 %v427, 0.6931472
    %v429 = vlog2.pop %v426
    %v430 = vmul.f32 %v429, 0.6931472
    %v431 = vsub.f32 %v415, %v428
    %v432 = vsub.f32 %v416, %v430
    %433 = vst [vmem:[%s4] sm:$0xff] %v431
    %434 = vst [vmem:[%s4 + $0x8] sm:$0xff] %v432
    // Predicated region
    $region34: #{gatvx_forward.1} parent=1 // pred_check
      _
    $region35: #{gatvx_forward.1} parent=1 // pred_check_branch
      %436 = sbr.rel (0) target = $region37
    $region36: #{gatvx_forward.1} parent=1 // pred_region
      _
    $region37: #{gatvx_forward.1} parent=1 // pred_fallthru
      _
    // Predicated region
    $region38: #{gatvx_forward.1} parent=1 // pred_check
      _
    $region39: #{gatvx_forward.1} parent=1 // pred_check_branch
      %438 = sbr.rel (0) target = $region41
    $region40: #{gatvx_forward.1} parent=1 // pred_region
      _
    $region41: #{gatvx_forward.1} parent=1 // pred_fallthru
      _
    %439 = vsyncpa [#allocation3], 1
    %440 = vsyncpa [#allocation5], 1
    %441 = vsyncpa [#allocation8], 1

</llo_original>
